<compile_context>
chip_gen: v7x
topology: tpu7x:2x2x1
jax: 0.10.0
libtpu: 0.0.40
codegen_flags: <defaults>
</compile_context>

<pallas_src>
import functools
import math

import jax
import jax.numpy as jnp
from jax.experimental import pallas as pl
from jax.experimental.pallas import tpu as pltpu


# ----------------------------------------------------------------------------- parameters
def get_timing_signal(input_size, length, min_timescale=1.0, max_timescale=10000.0):
    """Exact port of the PyTorch get_timing_signal (float32), shape (1, length, channels)."""
    channels = input_size
    position = jnp.arange(length, dtype=jnp.float32)
    num_timescales = channels // 2
    denom = float(num_timescales) - 1.0
    if denom <= 0.0:
        # Guard: the original divides by zero for channels < 4; fall back to 1.0.
        denom = 1.0
    log_timescale_increment = math.log(float(max_timescale) / float(min_timescale)) / denom
    inv_timescales = min_timescale * jnp.exp(
        jnp.arange(num_timescales, dtype=jnp.float32) * -log_timescale_increment
    )
    scaled_time = position[:, None] * inv_timescales[None, :]
    signal = jnp.concatenate([jnp.sin(scaled_time), jnp.cos(scaled_time)], axis=1)
    if input_size % 2 > 0:
        signal = jnp.pad(signal, ((0, 0), (0, 1)))
    return signal.reshape(1, length, channels)


# ----------------------------------------------------------------------------- kernel
def _add_pe_kernel(x_ref, pe_ref, o_ref):
    # x_ref/o_ref: (block_rows, W) tile of one batch element (batch dim squeezed out);
    # pe_ref: (block_rows, W) tile, already in x's dtype (cast once in the wrapper).
    o_ref[...] = x_ref[...] + pe_ref[...]


# ----------------------------------------------------------------------------- tiling helpers
_MIN_PALLAS_BYTES = 512 * 1024  # below this, fused XLA add beats the pallas_call overhead


def _choose_lane_width(n_flat):
    """Largest lane width (multiple of 128) that evenly divides the flattened row size."""
    for lw in (1024, 512, 256, 128):
        if n_flat % lw == 0:
            return lw
    return None


def _sublane_pack(dtype):
    """Sublane packing granularity: 8 rows for f32, 16 for bf16, 32 for 1-byte dtypes."""
    itemsize = jnp.dtype(dtype).itemsize
    return max(8, 32 // max(itemsize, 1))


@functools.lru_cache(maxsize=1)
def _tile_params():
    """(target bytes per block-buffer, vmem_limit_bytes) — generation aware, safe fallback."""
    block_bytes = 2 << 20   # 2 MiB/buffer: ~12 MiB live (x/out/pe double-buffered); v5e/v6e sweet spot
    vmem_limit = 32 << 20   # explicit limit so the tiling is legal under v5e's 16 MiB scoped default
    try:
        info = pltpu.get_tpu_info()
        ver = str(getattr(info, "chip_version", ""))
        if "7" in ver:
            # v7x: 3.2 TB/s HBM makes the ~0.35us/step overhead proportionally larger;
            # 4 MiB blocks (~24 MiB live) still fit well inside its 64 MiB physical VMEM.
            block_bytes = 4 << 20
            vmem_limit = 30 << 20
    except Exception:
        pass  # conservative defaults above are legal on every generation
    return block_bytes, vmem_limit


def _choose_block_rows(num_rows, row_bytes, sublane, target_bytes):
    """Row-tile size: multiple of `sublane` (or full extent), ~target_bytes per buffer,
    preferring an exact divisor of num_rows so every grid step is full-size/unmasked."""
    target = max(sublane, (target_bytes // max(row_bytes, 1)) // sublane * sublane)
    if num_rows <= target:
        return num_rows  # equal to the full dim -> always a legal block shape
    r = target
    while r >= sublane:
        if num_rows % r == 0:
            return r      # divisor: no ragged final tile
        r -= sublane
    return target         # ragged final tile; Pallas masks the edge (correct, slightly slower)


# ----------------------------------------------------------------------------- pallas call
def _pallas_add_pe(x3d, pe2d, block_rows, vmem_limit):
    """x3d: (B, R, W); pe2d: (R, W), same dtype.  Returns x3d + pe2d (broadcast over B)."""
    B, R, W = x3d.shape
    itemsize = jnp.dtype(x3d.dtype).itemsize
    grid = (pl.cdiv(R, block_rows), B)  # B innermost: pe block index constant -> pe stays resident
    cost = pl.CostEstimate(
        flops=B * R * W,
        transcendentals=0,
        bytes_accessed=2 * B * R * W * itemsize + R * W * itemsize,
    )
    return pl.pallas_call(
        _add_pe_kernel,
        out_shape=jax.ShapeDtypeStruct((B, R, W), x3d.dtype),
        grid_spec=pltpu.PrefetchScalarGridSpec(
            num_scalar_prefetch=0,
            grid=grid,
            in_specs=[
                pl.BlockSpec((pl.Squeezed(), block_rows, W), lambda r, b: (b, r, 0)),
                pl.BlockSpec((block_rows, W), lambda r, b: (r, 0)),
            ],
            out_specs=pl.BlockSpec((pl.Squeezed(), block_rows, W), lambda r, b: (b, r, 0)),
        ),
        compiler_params=pltpu.CompilerParams(
            dimension_semantics=("parallel", "parallel"),
            vmem_limit_bytes=vmem_limit,
        ),
        cost_estimate=cost,
    )(x3d, pe2d)


def add_fixed_position_embedding(x, pe, *, force_pallas=False):
    """x: (B, L, C); pe: (L, C) (any float dtype; cast once to x.dtype, matching PyTorch)."""
    B, L, C = x.shape
    assert pe.shape == (L, C), f"pe shape {pe.shape} does not match (L, C)=({L}, {C})"
    pe = pe.astype(x.dtype)  # torch's `input.new_tensor(pe)` semantics: add happens in x.dtype

    lane_width = _choose_lane_width(L * C)
    n_bytes = x.size * jnp.dtype(x.dtype).itemsize
    if lane_width is None or (n_bytes < _MIN_PALLAS_BYTES and not force_pallas):
        # Lane-sparse (last dim < 128 -> masked vst.msk) or tiny input: a plain fused XLA
        # add is strictly better than paying pallas_call / per-grid-step overhead.
        return x + pe[None]

    # Lane-dense path: flatten (L, C) -> (R, lane_width); full-width unmasked stores.
    R = (L * C) // lane_width
    x3 = x.reshape(B, R, lane_width)      # row-major metadata-only reshape
    pe2 = pe.reshape(R, lane_width)
    block_bytes, vmem_limit = _tile_params()
    block_rows = _choose_block_rows(
        R, lane_width * jnp.dtype(x.dtype).itemsize, _sublane_pack(x.dtype), block_bytes
    )
    out = _pallas_add_pe(x3, pe2, block_rows, vmem_limit)
    return out.reshape(B, L, C)


# ----------------------------------------------------------------------------- module
class FixedPositionEmbedding:
    """JAX/Pallas equivalent of the PyTorch module (batch_first layout, length_dim=1)."""

    def __init__(self, input_size, length=5000, min_timescale=1.0,
                 max_timescale=10000.0, batch_first=True, dtype=jnp.float32):
        self.pe = get_timing_signal(input_size, length, min_timescale, max_timescale).astype(dtype)
        self.length = length
        self.input_size = input_size
        self.batch_first = batch_first
        self._pe_cache = {}  # (L, dtype) -> (L, C) slice already cast to the activation dtype

    def _pe_for(self, L, dtype):
        key = (L, jnp.dtype(dtype).name)
        pe = self._pe_cache.get(key)
        if pe is None:
            if len(self._pe_cache) > 64:   # bound the cache for long-running variable-L serving
                self._pe_cache.clear()
            pe = self.pe[0, :L, :].astype(dtype)
            self._pe_cache[key] = pe
        return pe

    def __call__(self, x):
        B, L, C = x.shape
        if L > self.length:
            raise ValueError(f"sequence length {L} exceeds precomputed pe length {self.length}")
        if C != self.input_size:
            raise ValueError(f"channel dim {C} != input_size {self.input_size}")
        # TODO(synk): the PyTorch forward calls `open()` (a stray side-effecting bug);
        # intentionally not reproduced.
        return add_fixed_position_embedding(x, self._pe_for(L, x.dtype))


# ----------------------------------------------------------------------------- demo / checks
if __name__ == "__main__":
    key = jax.random.PRNGKey(0)
    k1, k2, k3, k4 = jax.random.split(key, 4)

    # Case 1: Pallas lane-dense path (1 MiB f32), flattened to (128, 1024) rows, pe resident over B.
    B, L, C = 2, 1024, 128
    x = jax.random.normal(k1, (B, L, C), dtype=jnp.float32)
    mod = FixedPositionEmbedding(input_size=C, length=L)
    out = jax.block_until_ready(mod(x))
    ref = x + mod.pe[0, :L, :]
    assert out.shape == (B, L, C)
    assert jnp.allclose(out, ref, atol=1e-6), "mismatch vs reference (Pallas lane-dense path)"

    # Case 2: tiny tensor -> XLA fast path (below the pallas_call overhead crossover).
    x2 = jax.random.normal(k2, (2, 8, 32), dtype=jnp.float32)
    mod2 = FixedPositionEmbedding(input_size=32, length=64)
    out2 = jax.block_until_ready(mod2(x2))
    ref2 = x2 + mod2.pe[0, :8, :]
    assert jnp.allclose(out2, ref2, atol=1e-6), "mismatch vs reference (tiny fast path)"

    # Case 3: odd channel count (lane-sparse) -> fused XLA fallback, never a masked-vst Pallas path.
    x3 = jax.random.normal(k3, (2, 16, 33), dtype=jnp.float32)
    mod3 = FixedPositionEmbedding(input_size=33, length=32)
    out3 = jax.block_until_ready(mod3(x3))
    ref3 = x3 + mod3.pe[0, :16, :]
    assert jnp.allclose(out3, ref3, atol=1e-6), "mismatch vs reference (lane-sparse fallback)"

    # Case 4: force the Pallas path at a small bf16 shape (sublane pack 16, pe cast once in wrapper).
    xb = jax.random.normal(k4, (2, 64, 128), dtype=jnp.bfloat16)
    peb = get_timing_signal(128, 64)[0]
    outb = jax.block_until_ready(add_fixed_position_embedding(xb, peb, force_pallas=True))
    refb = xb + peb.astype(jnp.bfloat16)[None]
    assert jnp.allclose(outb.astype(jnp.float32), refb.astype(jnp.float32), atol=1e-2), \
        "mismatch vs reference (forced bf16 Pallas path)"

    print("KERNEL_OK")
</pallas_src>

<mosaic_0001>
module attributes {stable_mosaic.version = 11 : i64} {
  func.func @_add_pe_kernel(%arg0: i32, %arg1: i32, %arg2: memref<1x128x1024xf32, #tpu.memory_space<vmem>>, %arg3: memref<128x1024xf32, #tpu.memory_space<vmem>>, %arg4: memref<1x128x1024xf32, #tpu.memory_space<vmem>>) attributes {dimension_semantics = [#tpu.dimension_semantics<parallel>, #tpu.dimension_semantics<parallel>], iteration_bounds = array<i64: 1, 2>, scalar_prefetch = 0 : i64, scratch_operands = 0 : i64, tpu.core_type = #tpu.core_type<tc>, window_params = [{transform_indices = @transform_0, window_bounds = array<i64: 1, 128, 1024>}, {transform_indices = @transform_1, window_bounds = array<i64: 128, 1024>}, {transform_indices = @transform_2, window_bounds = array<i64: 1, 128, 1024>}]} {
    %c0 = arith.constant 0 : index
    %c0_0 = arith.constant 0 : index
    %c0_1 = arith.constant 0 : index
    %0 = vector.load %arg2[%c0, %c0_0, %c0_1] : memref<1x128x1024xf32, #tpu.memory_space<vmem>>, vector<1x128x1024xf32>
    %1 = vector.shape_cast %0 : vector<1x128x1024xf32> to vector<128x1024xf32>
    %c0_2 = arith.constant 0 : index
    %c0_3 = arith.constant 0 : index
    %2 = vector.load %arg3[%c0_2, %c0_3] : memref<128x1024xf32, #tpu.memory_space<vmem>>, vector<128x1024xf32>
    %3 = arith.addf %1, %2 : vector<128x1024xf32>
    %c0_4 = arith.constant 0 : index
    %c0_5 = arith.constant 0 : index
    %c0_6 = arith.constant 0 : index
    %4 = vector.load %arg4[%c0_4, %c0_5, %c0_6] : memref<1x128x1024xf32, #tpu.memory_space<vmem>>, vector<1x128x1024xf32>
    %5 = vector.shape_cast %4 : vector<1x128x1024xf32> to vector<128x1024xf32>
    %6 = vector.shape_cast %3 : vector<128x1024xf32> to vector<1x128x1024xf32>
    tpu.vector_store %arg4[%c0_4, %c0_5, %c0_6], %6 {strides = array<i32>} : memref<1x128x1024xf32, #tpu.memory_space<vmem>>, vector<1x128x1024xf32>,
    return
  }
  func.func @transform_0(%arg0: i32, %arg1: i32) -> (i32, i32, i32) {
    %c0_i32 = arith.constant 0 : i32
    %c0_i32_0 = arith.constant 0 : i32
    return %arg1, %arg0, %c0_i32 : i32, i32, i32
  }
  func.func @transform_1(%arg0: i32, %arg1: i32) -> (i32, i32) {
    %c0_i32 = arith.constant 0 : i32
    %c0_i32_0 = arith.constant 0 : i32
    return %arg0, %c0_i32 : i32, i32
  }
  func.func @transform_2(%arg0: i32, %arg1: i32) -> (i32, i32, i32) {
    %c0_i32 = arith.constant 0 : i32
    %c0_i32_0 = arith.constant 0 : i32
    return %arg1, %arg0, %c0_i32 : i32, i32, i32
  }
}

</mosaic_0001>

<llo_original>
// kernel: tpu_custom_call.1
$region0: #{tpu_custom_call.1}
  #allocation0 [shape = 'u32[]', space=smem, size = 0x4, offset = 0x4, fixed_abs, tag = 'smem constant byte address 0x4 - core index']
  #allocation1 [shape = 'u32[144,128]{1,0:T(1,128)}', space=vmem, size = 0x12000, scoped, tag = 'internal scratch']
  %s0 = inlined_call_operand.hbm [shape: f32[2,128,1024], index: 0, kind: input, shape index: {}]
  %s1 = inlined_call_operand.hbm [shape: f32[128,1024], index: 1, kind: input, shape index: {}]
  %s2 = inlined_call_operand.hbm [shape: f32[2,128,1024], index: 2, kind: output, shape index: {}]
  %s3 = sld [smem:[#allocation0]]
  $region49: #{tpu_custom_call.1} parent=0
    _
  %s5 = ssub.s32 1, %s3
  %s6 = scalar_select 0, %s5, %s3
  $region1: #{tpu_custom_call.1} parent=0
    #allocation2 [shape = 'u8[1048576]{0}', space=vmem, size = 0x100000, scoped, tag = 'input window, operand 0']
    #allocation3 [shape = 's32[2]{0}', space=sflag, size = 0x8, scoped, tag = 'scoped memory for tpu_custom_call.1']
    #allocation4 [shape = 's32[2]{0}', space=sflag, size = 0x8, scoped, tag = 'scoped memory for tpu_custom_call.1']
    #allocation5 [shape = 'u8[524288]{0}', space=vmem, size = 0x80000, scoped, tag = 'input window, operand 1, single buffered']
    #allocation6 [shape = 's32[1]{0}', space=sflag, size = 0x4, scoped, tag = 'scoped memory for tpu_custom_call.1']
    #allocation7 [shape = 'u8[1048576]{0}', space=vmem, size = 0x100000, scoped, tag = 'output window, operand 0']
    %7 = vsyncpa [#allocation3], 0
    %s8 = scalar_lea.sflag [#allocation3], 1
    %9 = vsyncpa %s8, 0
    %10 = vsyncpa [#allocation6], 0
    %11 = vsyncpa [#allocation4], 0
    %s12 = scalar_lea.sflag [#allocation4], 1
    %13 = vsyncpa %s12, 0
    loop: start=0, step=1, limit=4
    $region2: #{tpu_custom_call.1} parent=1 // loop_pre_header
      _
    $region3: #{tpu_custom_call.1} parent=1 // loop_header
      %s15 = sphi 0, %s19
      %p16 = scmp.ge.s32.totalorder %s15, 4
      %s22 = sphi 0, %s34
      %s23 = sphi 0, %s30
      %s24 = sphi 0, %s22
      %s25 = sphi 0, %s23
      %s26 = sphi 0, %s24
      %s27 = sphi 0, %s25
      %s39 = sphi 0, %s41
      %s42 = sphi 0, %s39
      %s43 = sphi 0, %s42
      %s59 = sphi 0, %s43
      %s65 = sphi 0, %s67
      %s68 = sphi 0, %s65
      %s69 = sphi 0, %s68
      %s85 = sphi 0, %s69
      %s93 = sphi 0, %s95
      %s96 = sphi 0, %s93
      %s97 = sphi 0, %s96
      %s113 = sphi 0, %s97
    $region4: #{tpu_custom_call.1} parent=1 // loop_header_branch
      %18 = sbr.rel (%p16) target = $region8
    $region5: #{tpu_custom_call.1} parent=1 // loop_body
      %s20 = ssub.s32 %s15, 1
      %s21 = ssub.s32 %s15, 2
      %s28 = sadd.s32 1, %s23
      %p29 = scmp.ge.s32.totalorder %s28, 2
      %s30 = scalar_select %p29, 0, %s28
      %s31 = sadd.s32 1, %s22
      %s32 = scalar_select %p29, %s31, %s22
      %p33 = scmp.ge.s32.totalorder %s32, 1
      %s34 = scalar_select %p33, 0, %s32
      %s35 = ssub.s32 %s23, %s30
      %s36 = ssub.s32 %s22, %s34
      %s37 = sor.u32 %s35, %s36
      %p38 = scmp.eq.s32.totalorder %s37, 0
      %s40 = sadd.s32 %s39, 1
      %s41 = scalar_select %p38, %s39, %s40
      %p44 = pneg %p38
      %p45 = scmp.eq.s32.totalorder %s15, 1
      %p46 = por %p44, %p45
      %p47 = scmp.ne.s32.totalorder %s39, %s42
      %p48 = scmp.eq.s32.totalorder %s15, 0
      %p49 = por %p47, %p48
      %p50 = scmp.ne.s32.totalorder %s39, %s42
      %p51 = scmp.eq.s32.totalorder %s20, 1
      %p52 = por %p50, %p51
      %p53 = scmp.ne.s32.totalorder %s42, %s43
      %p54 = scmp.eq.s32.totalorder %s20, 0
      %p55 = por %p53, %p54
      %p56 = scmp.ne.s32.totalorder %s42, %s43
      %p57 = scmp.eq.s32.totalorder %s21, 1
      %p58 = por %p56, %p57
      %p60 = scmp.ne.s32.totalorder %s43, %s59
      %p61 = scmp.eq.s32.totalorder %s21, 0
      %p62 = por %p60, %p61
      %s63 = ssub.s32 %s22, %s34
      %p64 = scmp.eq.s32.totalorder %s63, 0
      %s66 = sadd.s32 %s65, 1
      %s67 = scalar_select %p64, %s65, %s66
      %p70 = pneg %p64
      %p71 = scmp.eq.s32.totalorder %s15, 1
      %p72 = por %p70, %p71
      %p73 = scmp.ne.s32.totalorder %s65, %s68
      %p74 = scmp.eq.s32.totalorder %s15, 0
      %p75 = por %p73, %p74
      %p76 = scmp.ne.s32.totalorder %s65, %s68
      %p77 = scmp.eq.s32.totalorder %s20, 1
      %p78 = por %p76, %p77
      %p79 = scmp.ne.s32.totalorder %s68, %s69
      %p80 = scmp.eq.s32.totalorder %s20, 0
      %p81 = por %p79, %p80
      %p82 = scmp.ne.s32.totalorder %s68, %s69
      %p83 = scmp.eq.s32.totalorder %s21, 1
      %p84 = por %p82, %p83
      %p86 = scmp.ne.s32.totalorder %s69, %s85
      %p87 = scmp.eq.s32.totalorder %s21, 0
      %p88 = por %p86, %p87
      %s89 = ssub.s32 %s23, %s30
      %s90 = ssub.s32 %s22, %s34
      %s91 = sor.u32 %s89, %s90
      %p92 = scmp.eq.s32.totalorder %s91, 0
      %s94 = sadd.s32 %s93, 1
      %s95 = scalar_select %p92, %s93, %s94
      %p98 = pneg %p92
      %p99 = scmp.eq.s32.totalorder %s15, 1
      %p100 = por %p98, %p99
      %p101 = scmp.ne.s32.totalorder %s93, %s96
      %p102 = scmp.eq.s32.totalorder %s15, 0
      %p103 = por %p101, %p102
      %p104 = scmp.ne.s32.totalorder %s93, %s96
      %p105 = scmp.eq.s32.totalorder %s20, 1
      %p106 = por %p104, %p105
      %p107 = scmp.ne.s32.totalorder %s96, %s97
      %p108 = scmp.eq.s32.totalorder %s20, 0
      %p109 = por %p107, %p108
      %p110 = scmp.ne.s32.totalorder %s96, %s97
      %p111 = scmp.eq.s32.totalorder %s21, 1
      %p112 = por %p110, %p111
      %p114 = scmp.ne.s32.totalorder %s97, %s113
      %p115 = scmp.eq.s32.totalorder %s21, 0
      %p116 = por %p114, %p115
      %p117 = scmp.le.s32.totalorder 1, %s15
      %p118 = scmp.lt.s32.totalorder %s15, 3
      %p119 = pnand %p117, %p118
      %p120 = pneg %p119
      // Predicated region
      $region9: #{tpu_custom_call.1} parent=5 // pred_check
        _
      $region10: #{tpu_custom_call.1} parent=5 // pred_check_branch
        %122 = sbr.rel (%p119) target = $region12
      $region11: #{tpu_custom_call.1} parent=5 // pred_region
        %s123 = ssub.s32 %s15, 1
        // Predicated region
        $region13: #{tpu_custom_call.1} parent=11 // pred_check
          %p124 = pneg %p81
        $region14: #{tpu_custom_call.1} parent=11 // pred_check_branch
          %126 = sbr.rel (%p124) target = $region16
        $region15: #{tpu_custom_call.1} parent=11 // pred_region
          %s127 = smul.u32 16, %s24
          %s129 = ssub.s32 16384, 16384
          %130 = vsyncadd [#allocation6], %s129
          %s131 = smul.addr %s127, 8
          %s132 = smul.addr %s131, 128
          %s133 = scalar_lea.hbm %s1, %s132
          %s134 = sshll.u32 [#allocation5], 4
          %s135 = int_to_ptr.vmem [resolvable:$true] %s134
          %140 = dma.hbm_to_vmem [thread:$0]  %s133, 16384, %s135, [#allocation6], 1024, 1024, 64
        $region16: #{tpu_custom_call.1} parent=11 // pred_fallthru
          _
      $region12: #{tpu_custom_call.1} parent=5 // pred_fallthru
        _
      %p141 = scmp.lt.s32.totalorder %s15, 2
      // Predicated region
      $region17: #{tpu_custom_call.1} parent=5 // pred_check
        %p142 = pneg %p141
      $region18: #{tpu_custom_call.1} parent=5 // pred_check_branch
        %144 = sbr.rel (%p142) target = $region20
      $region19: #{tpu_custom_call.1} parent=5 // pred_region
        // Predicated region
        $region21: #{tpu_custom_call.1} parent=19 // pred_check
          %p145 = pneg %p49
        $region22: #{tpu_custom_call.1} parent=19 // pred_check_branch
          %147 = sbr.rel (%p145) target = $region24
        $region23: #{tpu_custom_call.1} parent=19 // pred_region
          %s148 = sand.u32 %s39, 1
          %s149 = scalar_lea.sflag [#allocation3], %s148
          %s150 = sand.u32 %s39, 1
          %s151 = smul.addr %s150, 1024
          %s152 = scalar_lea.vmem [#allocation2], %s151
          %s153 = smul.u32 16, %s22
          %s155 = ssub.s32 16384, 16384
          %156 = vsyncadd %s149, %s155
          %s157 = smul.addr %s153, 8
          %s158 = smul.addr %s23, 128
          %s159 = sadd.s32 %s157, %s158
          %s160 = smul.addr %s159, 128
          %s161 = scalar_lea.hbm %s0, %s160
          %s162 = sshll.u32 %s152, 4
          %s163 = int_to_ptr.vmem [resolvable:$true] %s162
          %168 = dma.hbm_to_vmem [thread:$0]  %s161, 16384, %s163, %s149, 1024, 1024, 64
        $region24: #{tpu_custom_call.1} parent=19 // pred_fallthru
          _
      $region20: #{tpu_custom_call.1} parent=5 // pred_fallthru
        _
      %p169 = scmp.le.s32.totalorder 1, %s15
      %p170 = scmp.lt.s32.totalorder %s15, 3
      %p171 = pnand %p169, %p170
      %p172 = pneg %p171
      // Predicated region
      $region25: #{tpu_custom_call.1} parent=5 // pred_check
        _
      $region26: #{tpu_custom_call.1} parent=5 // pred_check_branch
        %174 = sbr.rel (%p171) target = $region28
      $region27: #{tpu_custom_call.1} parent=5 // pred_region
        %s175 = ssub.s32 %s15, 1
        %s176 = sand.u32 %s42, 1
        %s177 = scalar_lea.sflag [#allocation3], %s176
        %s178 = sand.u32 %s42, 1
        %s179 = smul.addr %s178, 1024
        %s180 = scalar_lea.vmem [#allocation2], %s179
        // Predicated region
        $region29: #{tpu_custom_call.1} parent=27 // pred_check
          %p181 = pneg %p55
        $region30: #{tpu_custom_call.1} parent=27 // pred_check_branch
          %183 = sbr.rel (%p181) target = $region32
        $region31: #{tpu_custom_call.1} parent=27 // pred_region
          %184 = dma.done %s177, 16384
        $region32: #{tpu_custom_call.1} parent=27 // pred_fallthru
          _
        // Predicated region
        $region33: #{tpu_custom_call.1} parent=27 // pred_check
          %p185 = pneg %p81
        $region34: #{tpu_custom_call.1} parent=27 // pred_check_branch
          %187 = sbr.rel (%p185) target = $region36
        $region35: #{tpu_custom_call.1} parent=27 // pred_region
          %188 = dma.done [#allocation6], 16384
        $region36: #{tpu_custom_call.1} parent=27 // pred_fallthru
          _
        %s189 = sand.u32 %s42, 1
        %s190 = scalar_lea.sflag [#allocation3], %s189
        %s191 = sand.u32 %s42, 1
        %s192 = smul.addr %s191, 1024
        %s193 = scalar_lea.vmem [#allocation2], %s192
        %p194 = pneg %p55
        %p195 = pneg %p52
        %p196 = pneg %p81
        %p197 = pneg %p78
        %p198 = pneg %p109
        %p199 = pneg %p106
        %s200 = sand.u32 %s96, 1
        %s201 = scalar_lea.sflag [#allocation4], %s200
        %s202 = sand.u32 %s96, 1
        %s203 = smul.addr %s202, 1024
        %s204 = scalar_lea.vmem [#allocation7], %s203
        %s205 = smul.u32 16, %s24
        %s206 = smul.u32 16, %s24
        %s207 = smul.u32 16, %s24
        %v208 = vld [vmem:[%s180] sm:$0xff]
        %v209 = vld [vmem:[%s180 + $0x8] sm:$0xff]
        %v210 = vld [vmem:[%s180 + $0x10] sm:$0xff]
        %v211 = vld [vmem:[%s180 + $0x18] sm:$0xff]
        %v212 = vld [vmem:[%s180 + $0x20] sm:$0xff]
        %v213 = vld [vmem:[%s180 + $0x28] sm:$0xff]
        %v214 = vld [vmem:[%s180 + $0x30] sm:$0xff]
        %v215 = vld [vmem:[%s180 + $0x38] sm:$0xff]
        %v216 = vld [vmem:[%s180 + $0x40] sm:$0xff]
        %v217 = vld [vmem:[%s180 + $0x48] sm:$0xff]
        %v218 = vld [vmem:[%s180 + $0x50] sm:$0xff]
        %v219 = vld [vmem:[%s180 + $0x58] sm:$0xff]
        %v220 = vld [vmem:[%s180 + $0x60] sm:$0xff]
        %v221 = vld [vmem:[%s180 + $0x68] sm:$0xff]
        %v222 = vld [vmem:[%s180 + $0x70] sm:$0xff]
        %v223 = vld [vmem:[%s180 + $0x78] sm:$0xff]
        %v224 = vld [vmem:[%s180 + $0x80] sm:$0xff]
        %v225 = vld [vmem:[%s180 + $0x88] sm:$0xff]
        %v226 = vld [vmem:[%s180 + $0x90] sm:$0xff]
        %v227 = vld [vmem:[%s180 + $0x98] sm:$0xff]
        %v228 = vld [vmem:[%s180 + $0xa0] sm:$0xff]
        %v229 = vld [vmem:[%s180 + $0xa8] sm:$0xff]
        %v230 = vld [vmem:[%s180 + $0xb0] sm:$0xff]
        %v231 = vld [vmem:[%s180 + $0xb8] sm:$0xff]
        %v232 = vld [vmem:[%s180 + $0xc0] sm:$0xff]
        %v233 = vld [vmem:[%s180 + $0xc8] sm:$0xff]
        %v234 = vld [vmem:[%s180 + $0xd0] sm:$0xff]
        %v235 = vld [vmem:[%s180 + $0xd8] sm:$0xff]
        %v236 = vld [vmem:[%s180 + $0xe0] sm:$0xff]
        %v237 = vld [vmem:[%s180 + $0xe8] sm:$0xff]
        %v238 = vld [vmem:[%s180 + $0xf0] sm:$0xff]
        %v239 = vld [vmem:[%s180 + $0xf8] sm:$0xff]
        %v240 = vld [vmem:[%s180 + $0x100] sm:$0xff]
        %v241 = vld [vmem:[%s180 + $0x108] sm:$0xff]
        %v242 = vld [vmem:[%s180 + $0x110] sm:$0xff]
        %v243 = vld [vmem:[%s180 + $0x118] sm:$0xff]
        %v244 = vld [vmem:[%s180 + $0x120] sm:$0xff]
        %v245 = vld [vmem:[%s180 + $0x128] sm:$0xff]
        %v246 = vld [vmem:[%s180 + $0x130] sm:$0xff]
        %v247 = vld [vmem:[%s180 + $0x138] sm:$0xff]
        %v248 = vld [vmem:[%s180 + $0x140] sm:$0xff]
        %v249 = vld [vmem:[%s180 + $0x148] sm:$0xff]
        %v250 = vld [vmem:[%s180 + $0x150] sm:$0xff]
        %v251 = vld [vmem:[%s180 + $0x158] sm:$0xff]
        %v252 = vld [vmem:[%s180 + $0x160] sm:$0xff]
        %v253 = vld [vmem:[%s180 + $0x168] sm:$0xff]
        %v254 = vld [vmem:[%s180 + $0x170] sm:$0xff]
        %v255 = vld [vmem:[%s180 + $0x178] sm:$0xff]
        %v256 = vld [vmem:[%s180 + $0x180] sm:$0xff]
        %v257 = vld [vmem:[%s180 + $0x188] sm:$0xff]
        %v258 = vld [vmem:[%s180 + $0x190] sm:$0xff]
        %v259 = vld [vmem:[%s180 + $0x198] sm:$0xff]
        %v260 = vld [vmem:[%s180 + $0x1a0] sm:$0xff]
        %v261 = vld [vmem:[%s180 + $0x1a8] sm:$0xff]
        %v262 = vld [vmem:[%s180 + $0x1b0] sm:$0xff]
        %v263 = vld [vmem:[%s180 + $0x1b8] sm:$0xff]
        %v264 = vld [vmem:[%s180 + $0x1c0] sm:$0xff]
        %v265 = vld [vmem:[%s180 + $0x1c8] sm:$0xff]
        %v266 = vld [vmem:[%s180 + $0x1d0] sm:$0xff]
        %v267 = vld [vmem:[%s180 + $0x1d8] sm:$0xff]
        %v268 = vld [vmem:[%s180 + $0x1e0] sm:$0xff]
        %v269 = vld [vmem:[%s180 + $0x1e8] sm:$0xff]
        %v270 = vld [vmem:[%s180 + $0x1f0] sm:$0xff]
        %v271 = vld [vmem:[%s180 + $0x1f8] sm:$0xff]
        %v272 = vld [vmem:[%s180 + $0x200] sm:$0xff]
        %v273 = vld [vmem:[%s180 + $0x208] sm:$0xff]
        %v274 = vld [vmem:[%s180 + $0x210] sm:$0xff]
        %v275 = vld [vmem:[%s180 + $0x218] sm:$0xff]
        %v276 = vld [vmem:[%s180 + $0x220] sm:$0xff]
        %v277 = vld [vmem:[%s180 + $0x228] sm:$0xff]
        %v278 = vld [vmem:[%s180 + $0x230] sm:$0xff]
        %v279 = vld [vmem:[%s180 + $0x238] sm:$0xff]
        %v280 = vld [vmem:[%s180 + $0x240] sm:$0xff]
        %v281 = vld [vmem:[%s180 + $0x248] sm:$0xff]
        %v282 = vld [vmem:[%s180 + $0x250] sm:$0xff]
        %v283 = vld [vmem:[%s180 + $0x258] sm:$0xff]
        %v284 = vld [vmem:[%s180 + $0x260] sm:$0xff]
        %v285 = vld [vmem:[%s180 + $0x268] sm:$0xff]
        %v286 = vld [vmem:[%s180 + $0x270] sm:$0xff]
        %v287 = vld [vmem:[%s180 + $0x278] sm:$0xff]
        %v288 = vld [vmem:[%s180 + $0x280] sm:$0xff]
        %v289 = vld [vmem:[%s180 + $0x288] sm:$0xff]
        %v290 = vld [vmem:[%s180 + $0x290] sm:$0xff]
        %v291 = vld [vmem:[%s180 + $0x298] sm:$0xff]
        %v292 = vld [vmem:[%s180 + $0x2a0] sm:$0xff]
        %v293 = vld [vmem:[%s180 + $0x2a8] sm:$0xff]
        %v294 = vld [vmem:[%s180 + $0x2b0] sm:$0xff]
        %v295 = vld [vmem:[%s180 + $0x2b8] sm:$0xff]
        %v296 = vld [vmem:[%s180 + $0x2c0] sm:$0xff]
        %v297 = vld [vmem:[%s180 + $0x2c8] sm:$0xff]
        %v298 = vld [vmem:[%s180 + $0x2d0] sm:$0xff]
        %v299 = vld [vmem:[%s180 + $0x2d8] sm:$0xff]
        %v300 = vld [vmem:[%s180 + $0x2e0] sm:$0xff]
        %v301 = vld [vmem:[%s180 + $0x2e8] sm:$0xff]
        %v302 = vld [vmem:[%s180 + $0x2f0] sm:$0xff]
        %v303 = vld [vmem:[%s180 + $0x2f8] sm:$0xff]
        %v304 = vld [vmem:[%s180 + $0x300] sm:$0xff]
        %v305 = vld [vmem:[%s180 + $0x308] sm:$0xff]
        %v306 = vld [vmem:[%s180 + $0x310] sm:$0xff]
        %v307 = vld [vmem:[%s180 + $0x318] sm:$0xff]
        %v308 = vld [vmem:[%s180 + $0x320] sm:$0xff]
        %v309 = vld [vmem:[%s180 + $0x328] sm:$0xff]
        %v310 = vld [vmem:[%s180 + $0x330] sm:$0xff]
        %v311 = vld [vmem:[%s180 + $0x338] sm:$0xff]
        %v312 = vld [vmem:[%s180 + $0x340] sm:$0xff]
        %v313 = vld [vmem:[%s180 + $0x348] sm:$0xff]
        %v314 = vld [vmem:[%s180 + $0x350] sm:$0xff]
        %v315 = vld [vmem:[%s180 + $0x358] sm:$0xff]
        %v316 = vld [vmem:[%s180 + $0x360] sm:$0xff]
        %v317 = vld [vmem:[%s180 + $0x368] sm:$0xff]
        %v318 = vld [vmem:[%s180 + $0x370] sm:$0xff]
        %v319 = vld [vmem:[%s180 + $0x378] sm:$0xff]
        %v320 = vld [vmem:[%s180 + $0x380] sm:$0xff]
        %v321 = vld [vmem:[%s180 + $0x388] sm:$0xff]
        %v322 = vld [vmem:[%s180 + $0x390] sm:$0xff]
        %v323 = vld [vmem:[%s180 + $0x398] sm:$0xff]
        %v324 = vld [vmem:[%s180 + $0x3a0] sm:$0xff]
        %v325 = vld [vmem:[%s180 + $0x3a8] sm:$0xff]
        %v326 = vld [vmem:[%s180 + $0x3b0] sm:$0xff]
        %v327 = vld [vmem:[%s180 + $0x3b8] sm:$0xff]
        %v328 = vld [vmem:[%s180 + $0x3c0] sm:$0xff]
        %v329 = vld [vmem:[%s180 + $0x3c8] sm:$0xff]
        %v330 = vld [vmem:[%s180 + $0x3d0] sm:$0xff]
        %v331 = vld [vmem:[%s180 + $0x3d8] sm:$0xff]
        %v332 = vld [vmem:[%s180 + $0x3e0] sm:$0xff]
        %v333 = vld [vmem:[%s180 + $0x3e8] sm:$0xff]
        %v334 = vld [vmem:[%s180 + $0x3f0] sm:$0xff]
        %v335 = vld [vmem:[%s180 + $0x3f8] sm:$0xff]
        %v336 = vld [vmem:[#allocation5] sm:$0xff]
        %v337 = vld [vmem:[#allocation5 + $0x8] sm:$0xff]
        %v338 = vld [vmem:[#allocation5 + $0x10] sm:$0xff]
        %v339 = vld [vmem:[#allocation5 + $0x18] sm:$0xff]
        %v340 = vld [vmem:[#allocation5 + $0x20] sm:$0xff]
        %v341 = vld [vmem:[#allocation5 + $0x28] sm:$0xff]
        %v342 = vld [vmem:[#allocation5 + $0x30] sm:$0xff]
        %v343 = vld [vmem:[#allocation5 + $0x38] sm:$0xff]
        %v344 = vld [vmem:[#allocation5 + $0x40] sm:$0xff]
        %v345 = vld [vmem:[#allocation5 + $0x48] sm:$0xff]
        %v346 = vld [vmem:[#allocation5 + $0x50] sm:$0xff]
        %v347 = vld [vmem:[#allocation5 + $0x58] sm:$0xff]
        %v348 = vld [vmem:[#allocation5 + $0x60] sm:$0xff]
        %v349 = vld [vmem:[#allocation5 + $0x68] sm:$0xff]
        %v350 = vld [vmem:[#allocation5 + $0x70] sm:$0xff]
        %v351 = vld [vmem:[#allocation5 + $0x78] sm:$0xff]
        %v352 = vld [vmem:[#allocation5 + $0x80] sm:$0xff]
        %v353 = vld [vmem:[#allocation5 + $0x88] sm:$0xff]
        %v354 = vld [vmem:[#allocation5 + $0x90] sm:$0xff]
        %v355 = vld [vmem:[#allocation5 + $0x98] sm:$0xff]
        %v356 = vld [vmem:[#allocation5 + $0xa0] sm:$0xff]
        %v357 = vld [vmem:[#allocation5 + $0xa8] sm:$0xff]
        %v358 = vld [vmem:[#allocation5 + $0xb0] sm:$0xff]
        %v359 = vld [vmem:[#allocation5 + $0xb8] sm:$0xff]
        %v360 = vld [vmem:[#allocation5 + $0xc0] sm:$0xff]
        %v361 = vld [vmem:[#allocation5 + $0xc8] sm:$0xff]
        %v362 = vld [vmem:[#allocation5 + $0xd0] sm:$0xff]
        %v363 = vld [vmem:[#allocation5 + $0xd8] sm:$0xff]
        %v364 = vld [vmem:[#allocation5 + $0xe0] sm:$0xff]
        %v365 = vld [vmem:[#allocation5 + $0xe8] sm:$0xff]
        %v366 = vld [vmem:[#allocation5 + $0xf0] sm:$0xff]
        %v367 = vld [vmem:[#allocation5 + $0xf8] sm:$0xff]
        %v368 = vld [vmem:[#allocation5 + $0x100] sm:$0xff]
        %v369 = vld [vmem:[#allocation5 + $0x108] sm:$0xff]
        %v370 = vld [vmem:[#allocation5 + $0x110] sm:$0xff]
        %v371 = vld [vmem:[#allocation5 + $0x118] sm:$0xff]
        %v372 = vld [vmem:[#allocation5 + $0x120] sm:$0xff]
        %v373 = vld [vmem:[#allocation5 + $0x128] sm:$0xff]
        %v374 = vld [vmem:[#allocation5 + $0x130] sm:$0xff]
        %v375 = vld [vmem:[#allocation5 + $0x138] sm:$0xff]
        %v376 = vld [vmem:[#allocation5 + $0x140] sm:$0xff]
        %v377 = vld [vmem:[#allocation5 + $0x148] sm:$0xff]
        %v378 = vld [vmem:[#allocation5 + $0x150] sm:$0xff]
        %v379 = vld [vmem:[#allocation5 + $0x158] sm:$0xff]
        %v380 = vld [vmem:[#allocation5 + $0x160] sm:$0xff]
        %v381 = vld [vmem:[#allocation5 + $0x168] sm:$0xff]
        %v382 = vld [vmem:[#allocation5 + $0x170] sm:$0xff]
        %v383 = vld [vmem:[#allocation5 + $0x178] sm:$0xff]
        %v384 = vld [vmem:[#allocation5 + $0x180] sm:$0xff]
        %v385 = vld [vmem:[#allocation5 + $0x188] sm:$0xff]
        %v386 = vld [vmem:[#allocation5 + $0x190] sm:$0xff]
        %v387 = vld [vmem:[#allocation5 + $0x198] sm:$0xff]
        %v388 = vld [vmem:[#allocation5 + $0x1a0] sm:$0xff]
        %v389 = vld [vmem:[#allocation5 + $0x1a8] sm:$0xff]
        %v390 = vld [vmem:[#allocation5 + $0x1b0] sm:$0xff]
        %v391 = vld [vmem:[#allocation5 + $0x1b8] sm:$0xff]
        %v392 = vld [vmem:[#allocation5 + $0x1c0] sm:$0xff]
        %v393 = vld [vmem:[#allocation5 + $0x1c8] sm:$0xff]
        %v394 = vld [vmem:[#allocation5 + $0x1d0] sm:$0xff]
        %v395 = vld [vmem:[#allocation5 + $0x1d8] sm:$0xff]
        %v396 = vld [vmem:[#allocation5 + $0x1e0] sm:$0xff]
        %v397 = vld [vmem:[#allocation5 + $0x1e8] sm:$0xff]
        %v398 = vld [vmem:[#allocation5 + $0x1f0] sm:$0xff]
        %v399 = vld [vmem:[#allocation5 + $0x1f8] sm:$0xff]
        %v400 = vld [vmem:[#allocation5 + $0x200] sm:$0xff]
        %v401 = vld [vmem:[#allocation5 + $0x208] sm:$0xff]
        %v402 = vld [vmem:[#allocation5 + $0x210] sm:$0xff]
        %v403 = vld [vmem:[#allocation5 + $0x218] sm:$0xff]
        %v404 = vld [vmem:[#allocation5 + $0x220] sm:$0xff]
        %v405 = vld [vmem:[#allocation5 + $0x228] sm:$0xff]
        %v406 = vld [vmem:[#allocation5 + $0x230] sm:$0xff]
        %v407 = vld [vmem:[#allocation5 + $0x238] sm:$0xff]
        %v408 = vld [vmem:[#allocation5 + $0x240] sm:$0xff]
        %v409 = vld [vmem:[#allocation5 + $0x248] sm:$0xff]
        %v410 = vld [vmem:[#allocation5 + $0x250] sm:$0xff]
        %v411 = vld [vmem:[#allocation5 + $0x258] sm:$0xff]
        %v412 = vld [vmem:[#allocation5 + $0x260] sm:$0xff]
        %v413 = vld [vmem:[#allocation5 + $0x268] sm:$0xff]
        %v414 = vld [vmem:[#allocation5 + $0x270] sm:$0xff]
        %v415 = vld [vmem:[#allocation5 + $0x278] sm:$0xff]
        %v416 = vld [vmem:[#allocation5 + $0x280] sm:$0xff]
        %v417 = vld [vmem:[#allocation5 + $0x288] sm:$0xff]
        %v418 = vld [vmem:[#allocation5 + $0x290] sm:$0xff]
        %v419 = vld [vmem:[#allocation5 + $0x298] sm:$0xff]
        %v420 = vld [vmem:[#allocation5 + $0x2a0] sm:$0xff]
        %v421 = vld [vmem:[#allocation5 + $0x2a8] sm:$0xff]
        %v422 = vld [vmem:[#allocation5 + $0x2b0] sm:$0xff]
        %v423 = vld [vmem:[#allocation5 + $0x2b8] sm:$0xff]
        %v424 = vld [vmem:[#allocation5 + $0x2c0] sm:$0xff]
        %v425 = vld [vmem:[#allocation5 + $0x2c8] sm:$0xff]
        %v426 = vld [vmem:[#allocation5 + $0x2d0] sm:$0xff]
        %v427 = vld [vmem:[#allocation5 + $0x2d8] sm:$0xff]
        %v428 = vld [vmem:[#allocation5 + $0x2e0] sm:$0xff]
        %v429 = vld [vmem:[#allocation5 + $0x2e8] sm:$0xff]
        %v430 = vld [vmem:[#allocation5 + $0x2f0] sm:$0xff]
        %v431 = vld [vmem:[#allocation5 + $0x2f8] sm:$0xff]
        %v432 = vld [vmem:[#allocation5 + $0x300] sm:$0xff]
        %v433 = vld [vmem:[#allocation5 + $0x308] sm:$0xff]
        %v434 = vld [vmem:[#allocation5 + $0x310] sm:$0xff]
        %v435 = vld [vmem:[#allocation5 + $0x318] sm:$0xff]
        %v436 = vld [vmem:[#allocation5 + $0x320] sm:$0xff]
        %v437 = vld [vmem:[#allocation5 + $0x328] sm:$0xff]
        %v438 = vld [vmem:[#allocation5 + $0x330] sm:$0xff]
        %v439 = vld [vmem:[#allocation5 + $0x338] sm:$0xff]
        %v440 = vld [vmem:[#allocation5 + $0x340] sm:$0xff]
        %v441 = vld [vmem:[#allocation5 + $0x348] sm:$0xff]
        %v442 = vld [vmem:[#allocation5 + $0x350] sm:$0xff]
        %v443 = vld [vmem:[#allocation5 + $0x358] sm:$0xff]
        %v444 = vld [vmem:[#allocation5 + $0x360] sm:$0xff]
        %v445 = vld [vmem:[#allocation5 + $0x368] sm:$0xff]
        %v446 = vld [vmem:[#allocation5 + $0x370] sm:$0xff]
        %v447 = vld [vmem:[#allocation5 + $0x378] sm:$0xff]
        %v448 = vld [vmem:[#allocation5 + $0x380] sm:$0xff]
        %v449 = vld [vmem:[#allocation5 + $0x388] sm:$0xff]
        %v450 = vld [vmem:[#allocation5 + $0x390] sm:$0xff]
        %v451 = vld [vmem:[#allocation5 + $0x398] sm:$0xff]
        %v452 = vld [vmem:[#allocation5 + $0x3a0] sm:$0xff]
        %v453 = vld [vmem:[#allocation5 + $0x3a8] sm:$0xff]
        %v454 = vld [vmem:[#allocation5 + $0x3b0] sm:$0xff]
        %v455 = vld [vmem:[#allocation5 + $0x3b8] sm:$0xff]
        %v456 = vld [vmem:[#allocation5 + $0x3c0] sm:$0xff]
        %v457 = vld [vmem:[#allocation5 + $0x3c8] sm:$0xff]
        %v458 = vld [vmem:[#allocation5 + $0x3d0] sm:$0xff]
        %v459 = vld [vmem:[#allocation5 + $0x3d8] sm:$0xff]
        %v460 = vld [vmem:[#allocation5 + $0x3e0] sm:$0xff]
        %v461 = vld [vmem:[#allocation5 + $0x3e8] sm:$0xff]
        %v462 = vld [vmem:[#allocation5 + $0x3f0] sm:$0xff]
        %v463 = vld [vmem:[#allocation5 + $0x3f8] sm:$0xff]
        %v464 = vadd.f32 %v208, %v336
        %v465 = vadd.f32 %v209, %v337
        %v466 = vadd.f32 %v210, %v338
        %v467 = vadd.f32 %v211, %v339
        %v468 = vadd.f32 %v212, %v340
        %v469 = vadd.f32 %v213, %v341
        %v470 = vadd.f32 %v214, %v342
        %v471 = vadd.f32 %v215, %v343
        %v472 = vadd.f32 %v216, %v344
        %v473 = vadd.f32 %v217, %v345
        %v474 = vadd.f32 %v218, %v346
        %v475 = vadd.f32 %v219, %v347
        %v476 = vadd.f32 %v220, %v348
        %v477 = vadd.f32 %v221, %v349
        %v478 = vadd.f32 %v222, %v350
        %v479 = vadd.f32 %v223, %v351
        %v480 = vadd.f32 %v224, %v352
        %v481 = vadd.f32 %v225, %v353
        %v482 = vadd.f32 %v226, %v354
        %v483 = vadd.f32 %v227, %v355
        %v484 = vadd.f32 %v228, %v356
        %v485 = vadd.f32 %v229, %v357
        %v486 = vadd.f32 %v230, %v358
        %v487 = vadd.f32 %v231, %v359
        %v488 = vadd.f32 %v232, %v360
        %v489 = vadd.f32 %v233, %v361
        %v490 = vadd.f32 %v234, %v362
        %v491 = vadd.f32 %v235, %v363
        %v492 = vadd.f32 %v236, %v364
        %v493 = vadd.f32 %v237, %v365
        %v494 = vadd.f32 %v238, %v366
        %v495 = vadd.f32 %v239, %v367
        %v496 = vadd.f32 %v240, %v368
        %v497 = vadd.f32 %v241, %v369
        %v498 = vadd.f32 %v242, %v370
        %v499 = vadd.f32 %v243, %v371
        %v500 = vadd.f32 %v244, %v372
        %v501 = vadd.f32 %v245, %v373
        %v502 = vadd.f32 %v246, %v374
        %v503 = vadd.f32 %v247, %v375
        %v504 = vadd.f32 %v248, %v376
        %v505 = vadd.f32 %v249, %v377
        %v506 = vadd.f32 %v250, %v378
        %v507 = vadd.f32 %v251, %v379
        %v508 = vadd.f32 %v252, %v380
        %v509 = vadd.f32 %v253, %v381
        %v510 = vadd.f32 %v254, %v382
        %v511 = vadd.f32 %v255, %v383
        %v512 = vadd.f32 %v256, %v384
        %v513 = vadd.f32 %v257, %v385
        %v514 = vadd.f32 %v258, %v386
        %v515 = vadd.f32 %v259, %v387
        %v516 = vadd.f32 %v260, %v388
        %v517 = vadd.f32 %v261, %v389
        %v518 = vadd.f32 %v262, %v390
        %v519 = vadd.f32 %v263, %v391
        %v520 = vadd.f32 %v264, %v392
        %v521 = vadd.f32 %v265, %v393
        %v522 = vadd.f32 %v266, %v394
        %v523 = vadd.f32 %v267, %v395
        %v524 = vadd.f32 %v268, %v396
        %v525 = vadd.f32 %v269, %v397
        %v526 = vadd.f32 %v270, %v398
        %v527 = vadd.f32 %v271, %v399
        %v528 = vadd.f32 %v272, %v400
        %v529 = vadd.f32 %v273, %v401
        %v530 = vadd.f32 %v274, %v402
        %v531 = vadd.f32 %v275, %v403
        %v532 = vadd.f32 %v276, %v404
        %v533 = vadd.f32 %v277, %v405
        %v534 = vadd.f32 %v278, %v406
        %v535 = vadd.f32 %v279, %v407
        %v536 = vadd.f32 %v280, %v408
        %v537 = vadd.f32 %v281, %v409
        %v538 = vadd.f32 %v282, %v410
        %v539 = vadd.f32 %v283, %v411
        %v540 = vadd.f32 %v284, %v412
        %v541 = vadd.f32 %v285, %v413
        %v542 = vadd.f32 %v286, %v414
        %v543 = vadd.f32 %v287, %v415
        %v544 = vadd.f32 %v288, %v416
        %v545 = vadd.f32 %v289, %v417
        %v546 = vadd.f32 %v290, %v418
        %v547 = vadd.f32 %v291, %v419
        %v548 = vadd.f32 %v292, %v420
        %v549 = vadd.f32 %v293, %v421
        %v550 = vadd.f32 %v294, %v422
        %v551 = vadd.f32 %v295, %v423
        %v552 = vadd.f32 %v296, %v424
        %v553 = vadd.f32 %v297, %v425
        %v554 = vadd.f32 %v298, %v426
        %v555 = vadd.f32 %v299, %v427
        %v556 = vadd.f32 %v300, %v428
        %v557 = vadd.f32 %v301, %v429
        %v558 = vadd.f32 %v302, %v430
        %v559 = vadd.f32 %v303, %v431
        %v560 = vadd.f32 %v304, %v432
        %v561 = vadd.f32 %v305, %v433
        %v562 = vadd.f32 %v306, %v434
        %v563 = vadd.f32 %v307, %v435
        %v564 = vadd.f32 %v308, %v436
        %v565 = vadd.f32 %v309, %v437
        %v566 = vadd.f32 %v310, %v438
        %v567 = vadd.f32 %v311, %v439
        %v568 = vadd.f32 %v312, %v440
        %v569 = vadd.f32 %v313, %v441
        %v570 = vadd.f32 %v314, %v442
        %v571 = vadd.f32 %v315, %v443
        %v572 = vadd.f32 %v316, %v444
        %v573 = vadd.f32 %v317, %v445
        %v574 = vadd.f32 %v318, %v446
        %v575 = vadd.f32 %v319, %v447
        %v576 = vadd.f32 %v320, %v448
        %v577 = vadd.f32 %v321, %v449
        %v578 = vadd.f32 %v322, %v450
        %v579 = vadd.f32 %v323, %v451
        %v580 = vadd.f32 %v324, %v452
        %v581 = vadd.f32 %v325, %v453
        %v582 = vadd.f32 %v326, %v454
        %v583 = vadd.f32 %v327, %v455
        %v584 = vadd.f32 %v328, %v456
        %v585 = vadd.f32 %v329, %v457
        %v586 = vadd.f32 %v330, %v458
        %v587 = vadd.f32 %v331, %v459
        %v588 = vadd.f32 %v332, %v460
        %v589 = vadd.f32 %v333, %v461
        %v590 = vadd.f32 %v334, %v462
        %v591 = vadd.f32 %v335, %v463
        %592 = vst [vmem:[%s204] sm:$0xff] %v464
        %593 = vst [vmem:[%s204 + $0x8] sm:$0xff] %v465
        %594 = vst [vmem:[%s204 + $0x10] sm:$0xff] %v466
        %595 = vst [vmem:[%s204 + $0x18] sm:$0xff] %v467
        %596 = vst [vmem:[%s204 + $0x20] sm:$0xff] %v468
        %597 = vst [vmem:[%s204 + $0x28] sm:$0xff] %v469
        %598 = vst [vmem:[%s204 + $0x30] sm:$0xff] %v470
        %599 = vst [vmem:[%s204 + $0x38] sm:$0xff] %v471
        %600 = vst [vmem:[%s204 + $0x40] sm:$0xff] %v472
        %601 = vst [vmem:[%s204 + $0x48] sm:$0xff] %v473
        %602 = vst [vmem:[%s204 + $0x50] sm:$0xff] %v474
        %603 = vst [vmem:[%s204 + $0x58] sm:$0xff] %v475
        %604 = vst [vmem:[%s204 + $0x60] sm:$0xff] %v476
        %605 = vst [vmem:[%s204 + $0x68] sm:$0xff] %v477
        %606 = vst [vmem:[%s204 + $0x70] sm:$0xff] %v478
        %607 = vst [vmem:[%s204 + $0x78] sm:$0xff] %v479
        %608 = vst [vmem:[%s204 + $0x80] sm:$0xff] %v480
        %609 = vst [vmem:[%s204 + $0x88] sm:$0xff] %v481
        %610 = vst [vmem:[%s204 + $0x90] sm:$0xff] %v482
        %611 = vst [vmem:[%s204 + $0x98] sm:$0xff] %v483
        %612 = vst [vmem:[%s204 + $0xa0] sm:$0xff] %v484
        %613 = vst [vmem:[%s204 + $0xa8] sm:$0xff] %v485
        %614 = vst [vmem:[%s204 + $0xb0] sm:$0xff] %v486
        %615 = vst [vmem:[%s204 + $0xb8] sm:$0xff] %v487
        %616 = vst [vmem:[%s204 + $0xc0] sm:$0xff] %v488
        %617 = vst [vmem:[%s204 + $0xc8] sm:$0xff] %v489
        %618 = vst [vmem:[%s204 + $0xd0] sm:$0xff] %v490
        %619 = vst [vmem:[%s204 + $0xd8] sm:$0xff] %v491
        %620 = vst [vmem:[%s204 + $0xe0] sm:$0xff] %v492
        %621 = vst [vmem:[%s204 + $0xe8] sm:$0xff] %v493
        %622 = vst [vmem:[%s204 + $0xf0] sm:$0xff] %v494
        %623 = vst [vmem:[%s204 + $0xf8] sm:$0xff] %v495
        %624 = vst [vmem:[%s204 + $0x100] sm:$0xff] %v496
        %625 = vst [vmem:[%s204 + $0x108] sm:$0xff] %v497
        %626 = vst [vmem:[%s204 + $0x110] sm:$0xff] %v498
        %627 = vst [vmem:[%s204 + $0x118] sm:$0xff] %v499
        %628 = vst [vmem:[%s204 + $0x120] sm:$0xff] %v500
        %629 = vst [vmem:[%s204 + $0x128] sm:$0xff] %v501
        %630 = vst [vmem:[%s204 + $0x130] sm:$0xff] %v502
        %631 = vst [vmem:[%s204 + $0x138] sm:$0xff] %v503
        %632 = vst [vmem:[%s204 + $0x140] sm:$0xff] %v504
        %633 = vst [vmem:[%s204 + $0x148] sm:$0xff] %v505
        %634 = vst [vmem:[%s204 + $0x150] sm:$0xff] %v506
        %635 = vst [vmem:[%s204 + $0x158] sm:$0xff] %v507
        %636 = vst [vmem:[%s204 + $0x160] sm:$0xff] %v508
        %637 = vst [vmem:[%s204 + $0x168] sm:$0xff] %v509
        %638 = vst [vmem:[%s204 + $0x170] sm:$0xff] %v510
        %639 = vst [vmem:[%s204 + $0x178] sm:$0xff] %v511
        %640 = vst [vmem:[%s204 + $0x180] sm:$0xff] %v512
        %641 = vst [vmem:[%s204 + $0x188] sm:$0xff] %v513
        %642 = vst [vmem:[%s204 + $0x190] sm:$0xff] %v514
        %643 = vst [vmem:[%s204 + $0x198] sm:$0xff] %v515
        %644 = vst [vmem:[%s204 + $0x1a0] sm:$0xff] %v516
        %645 = vst [vmem:[%s204 + $0x1a8] sm:$0xff] %v517
        %646 = vst [vmem:[%s204 + $0x1b0] sm:$0xff] %v518
        %647 = vst [vmem:[%s204 + $0x1b8] sm:$0xff] %v519
        %648 = vst [vmem:[%s204 + $0x1c0] sm:$0xff] %v520
        %649 = vst [vmem:[%s204 + $0x1c8] sm:$0xff] %v521
        %650 = vst [vmem:[%s204 + $0x1d0] sm:$0xff] %v522
        %651 = vst [vmem:[%s204 + $0x1d8] sm:$0xff] %v523
        %652 = vst [vmem:[%s204 + $0x1e0] sm:$0xff] %v524
        %653 = vst [vmem:[%s204 + $0x1e8] sm:$0xff] %v525
        %654 = vst [vmem:[%s204 + $0x1f0] sm:$0xff] %v526
        %655 = vst [vmem:[%s204 + $0x1f8] sm:$0xff] %v527
        %656 = vst [vmem:[%s204 + $0x200] sm:$0xff] %v528
        %657 = vst [vmem:[%s204 + $0x208] sm:$0xff] %v529
        %658 = vst [vmem:[%s204 + $0x210] sm:$0xff] %v530
        %659 = vst [vmem:[%s204 + $0x218] sm:$0xff] %v531
        %660 = vst [vmem:[%s204 + $0x220] sm:$0xff] %v532
        %661 = vst [vmem:[%s204 + $0x228] sm:$0xff] %v533
        %662 = vst [vmem:[%s204 + $0x230] sm:$0xff] %v534
        %663 = vst [vmem:[%s204 + $0x238] sm:$0xff] %v535
        %664 = vst [vmem:[%s204 + $0x240] sm:$0xff] %v536
        %665 = vst [vmem:[%s204 + $0x248] sm:$0xff] %v537
        %666 = vst [vmem:[%s204 + $0x250] sm:$0xff] %v538
        %667 = vst [vmem:[%s204 + $0x258] sm:$0xff] %v539
        %668 = vst [vmem:[%s204 + $0x260] sm:$0xff] %v540
        %669 = vst [vmem:[%s204 + $0x268] sm:$0xff] %v541
        %670 = vst [vmem:[%s204 + $0x270] sm:$0xff] %v542
        %671 = vst [vmem:[%s204 + $0x278] sm:$0xff] %v543
        %672 = vst [vmem:[%s204 + $0x280] sm:$0xff] %v544
        %673 = vst [vmem:[%s204 + $0x288] sm:$0xff] %v545
        %674 = vst [vmem:[%s204 + $0x290] sm:$0xff] %v546
        %675 = vst [vmem:[%s204 + $0x298] sm:$0xff] %v547
        %676 = vst [vmem:[%s204 + $0x2a0] sm:$0xff] %v548
        %677 = vst [vmem:[%s204 + $0x2a8] sm:$0xff] %v549
        %678 = vst [vmem:[%s204 + $0x2b0] sm:$0xff] %v550
        %679 = vst [vmem:[%s204 + $0x2b8] sm:$0xff] %v551
        %680 = vst [vmem:[%s204 + $0x2c0] sm:$0xff] %v552
        %681 = vst [vmem:[%s204 + $0x2c8] sm:$0xff] %v553
        %682 = vst [vmem:[%s204 + $0x2d0] sm:$0xff] %v554
        %683 = vst [vmem:[%s204 + $0x2d8] sm:$0xff] %v555
        %684 = vst [vmem:[%s204 + $0x2e0] sm:$0xff] %v556
        %685 = vst [vmem:[%s204 + $0x2e8] sm:$0xff] %v557
        %686 = vst [vmem:[%s204 + $0x2f0] sm:$0xff] %v558
        %687 = vst [vmem:[%s204 + $0x2f8] sm:$0xff] %v559
        %688 = vst [vmem:[%s204 + $0x300] sm:$0xff] %v560
        %689 = vst [vmem:[%s204 + $0x308] sm:$0xff] %v561
        %690 = vst [vmem:[%s204 + $0x310] sm:$0xff] %v562
        %691 = vst [vmem:[%s204 + $0x318] sm:$0xff] %v563
        %692 = vst [vmem:[%s204 + $0x320] sm:$0xff] %v564
        %693 = vst [vmem:[%s204 + $0x328] sm:$0xff] %v565
        %694 = vst [vmem:[%s204 + $0x330] sm:$0xff] %v566
        %695 = vst [vmem:[%s204 + $0x338] sm:$0xff] %v567
        %696 = vst [vmem:[%s204 + $0x340] sm:$0xff] %v568
        %697 = vst [vmem:[%s204 + $0x348] sm:$0xff] %v569
        %698 = vst [vmem:[%s204 + $0x350] sm:$0xff] %v570
        %699 = vst [vmem:[%s204 + $0x358] sm:$0xff] %v571
        %700 = vst [vmem:[%s204 + $0x360] sm:$0xff] %v572
        %701 = vst [vmem:[%s204 + $0x368] sm:$0xff] %v573
        %702 = vst [vmem:[%s204 + $0x370] sm:$0xff] %v574
        %703 = vst [vmem:[%s204 + $0x378] sm:$0xff] %v575
        %704 = vst [vmem:[%s204 + $0x380] sm:$0xff] %v576
        %705 = vst [vmem:[%s204 + $0x388] sm:$0xff] %v577
        %706 = vst [vmem:[%s204 + $0x390] sm:$0xff] %v578
        %707 = vst [vmem:[%s204 + $0x398] sm:$0xff] %v579
        %708 = vst [vmem:[%s204 + $0x3a0] sm:$0xff] %v580
        %709 = vst [vmem:[%s204 + $0x3a8] sm:$0xff] %v581
        %710 = vst [vmem:[%s204 + $0x3b0] sm:$0xff] %v582
        %711 = vst [vmem:[%s204 + $0x3b8] sm:$0xff] %v583
        %712 = vst [vmem:[%s204 + $0x3c0] sm:$0xff] %v584
        %713 = vst [vmem:[%s204 + $0x3c8] sm:$0xff] %v585
        %714 = vst [vmem:[%s204 + $0x3d0] sm:$0xff] %v586
        %715 = vst [vmem:[%s204 + $0x3d8] sm:$0xff] %v587
        %716 = vst [vmem:[%s204 + $0x3e0] sm:$0xff] %v588
        %717 = vst [vmem:[%s204 + $0x3e8] sm:$0xff] %v589
        %718 = vst [vmem:[%s204 + $0x3f0] sm:$0xff] %v590
        %719 = vst [vmem:[%s204 + $0x3f8] sm:$0xff] %v591
        %s720 = sand.u32 %s96, 1
        %s721 = scalar_lea.sflag [#allocation4], %s720
        %s722 = sand.u32 %s96, 1
        %s723 = smul.addr %s722, 1024
        %s724 = scalar_lea.vmem [#allocation7], %s723
        // Predicated region
        $region37: #{tpu_custom_call.1} parent=27 // pred_check
          %p725 = pneg %p106
        $region38: #{tpu_custom_call.1} parent=27 // pred_check_branch
          %727 = sbr.rel (%p725) target = $region40
        $region39: #{tpu_custom_call.1} parent=27 // pred_region
          %s728 = smul.u32 16, %s24
          %s730 = ssub.s32 16384, 16384
          %731 = vsyncadd %s721, %s730
          %s732 = smul.addr %s728, 8
          %s733 = smul.addr %s25, 128
          %s734 = sadd.s32 %s732, %s733
          %s735 = smul.addr %s734, 128
          %s736 = scalar_lea.hbm %s2, %s735
          %s737 = sshll.u32 %s724, 4
          %s738 = int_to_ptr.vmem [resolvable:$true] %s737
          %743 = dma.vmem_to_hbm [thread:$0]  %s738, 16384, %s736, %s721, 1024, 1024, 64
        $region40: #{tpu_custom_call.1} parent=27 // pred_fallthru
          _
      $region28: #{tpu_custom_call.1} parent=5 // pred_fallthru
        _
      %p744 = scmp.le.s32.totalorder 2, %s15
      // Predicated region
      $region41: #{tpu_custom_call.1} parent=5 // pred_check
        %p745 = pneg %p744
      $region42: #{tpu_custom_call.1} parent=5 // pred_check_branch
        %747 = sbr.rel (%p745) target = $region44
      $region43: #{tpu_custom_call.1} parent=5 // pred_region
        %s748 = ssub.s32 %s15, 2
        // Predicated region
        $region45: #{tpu_custom_call.1} parent=43 // pred_check
          %p749 = pneg %p112
        $region46: #{tpu_custom_call.1} parent=43 // pred_check_branch
          %751 = sbr.rel (%p749) target = $region48
        $region47: #{tpu_custom_call.1} parent=43 // pred_region
          %s752 = sand.u32 %s97, 1
          %s753 = scalar_lea.sflag [#allocation4], %s752
          %s754 = sand.u32 %s97, 1
          %s755 = smul.addr %s754, 1024
          %s756 = scalar_lea.vmem [#allocation7], %s755
          %757 = dma.done %s753, 16384
        $region48: #{tpu_custom_call.1} parent=43 // pred_fallthru
          _
      $region44: #{tpu_custom_call.1} parent=5 // pred_fallthru
        _
    $region6: #{tpu_custom_call.1} parent=1 // loop_footer
      %s19 = sadd.s32 1, %s15
    $region7: #{tpu_custom_call.1} parent=1 // loop_footer_branch
      %14 = sbr.rel target = $region3
    $region8: #{tpu_custom_call.1} parent=1 // loop_exit
      _
    %758 = vsyncpa [#allocation3], 1
    %s759 = scalar_lea.sflag [#allocation3], 1
    %760 = vsyncpa %s759, 1
    %761 = vsyncpa [#allocation6], 1
    %762 = vsyncpa [#allocation4], 1
    %s763 = scalar_lea.sflag [#allocation4], 1
    %764 = vsyncpa %s763, 1

</llo_original>
